<compile_context>
chip_gen: v5e
topology: v5e:2x2
jax: 0.10.0
libtpu: 0.0.40
codegen_flags: <defaults>
</compile_context>

<pallas_src>
import functools
import math

import jax
import jax.numpy as jnp
from jax.experimental import pallas as pl
from jax.experimental.pallas import tpu as pltpu


_MASK_FILL = -1e30  # finite "minus infinity" keeps the online softmax NaN-free


def _round_up(x, m):
    return (x + m - 1) // m * m


def _pick_tile(dim, target, align):
    """Largest multiple of `align` <= target that divides `dim` (dim % align == 0)."""
    if dim <= target:
        return dim
    t = (target // align) * align
    while t >= align:
        if dim % t == 0:
            return t
        t -= align
    return dim


def _pad_axis(x, axis, new_size):
    pad = new_size - x.shape[axis]
    if pad == 0:
        return x
    cfg = [(0, 0)] * x.ndim
    cfg[axis] = (0, pad)
    return jnp.pad(x, cfg)


# ----------------------------------------------------------------------------
# q/k/v projection with fused head split: (B, S, K) @ (H, K, D) -> (B, H, S, D)
# ----------------------------------------------------------------------------
def _head_split_proj_kernel(x_ref, w_ref, b_ref, o_ref, *, num_heads):
    # x_ref: (1, ts, K); w_ref: (H, K, D) resident; b_ref: (H, 1, D); o_ref: (1, H, ts, D)
    x = x_ref[0].astype(jnp.bfloat16)
    for h in range(num_heads):
        y = jax.lax.dot_general(
            x, w_ref[h].astype(jnp.bfloat16),
            (((1,), (0,)), ((), ())),
            preferred_element_type=jnp.float32)
        o_ref[0, h] = (y + b_ref[h].astype(jnp.float32)).astype(o_ref.dtype)


def _project_to_heads(x, w3, b3):
    B, S, K = x.shape
    H, _, D = w3.shape
    ts = _pick_tile(S, 256, 8)
    return pl.pallas_call(
        functools.partial(_head_split_proj_kernel, num_heads=H),
        out_shape=jax.ShapeDtypeStruct((B, H, S, D), x.dtype),
        grid_spec=pltpu.PrefetchScalarGridSpec(
            num_scalar_prefetch=0,
            grid=(B, S // ts),
            in_specs=[
                pl.BlockSpec((1, ts, K), lambda b, s: (b, s, 0)),
                pl.BlockSpec((H, K, D), lambda b, s: (0, 0, 0)),   # weight resident
                pl.BlockSpec((H, 1, D), lambda b, s: (0, 0, 0)),   # bias resident
            ],
            out_specs=pl.BlockSpec((1, H, ts, D), lambda b, s: (b, 0, s, 0)),
        ),
        compiler_params=pltpu.CompilerParams(
            dimension_semantics=("parallel", "parallel")),
    )(x, w3, b3)


# ----------------------------------------------------------------------------
# Flash attention core: grid (B, H, Sq/tq, Sk/tkv), online softmax over keys
# ----------------------------------------------------------------------------
def _flash_attn_kernel(q_ref, k_ref, v_ref, mask_ref, o_ref,
                       m_ref, l_ref, acc_ref, *, scale):
    ki = pl.program_id(3)

    @pl.when(ki == 0)
    def _():
        m_ref[...] = jnp.full_like(m_ref, -jnp.inf)
        l_ref[...] = jnp.zeros_like(l_ref)
        acc_ref[...] = jnp.zeros_like(acc_ref)

    q = q_ref[0, 0].astype(jnp.bfloat16)                       # (tq, D)
    k = k_ref[0, 0].astype(jnp.bfloat16)                       # (tkv, D)
    s = jax.lax.dot_general(
        q, k, (((1,), (1,)), ((), ())),
        preferred_element_type=jnp.float32) * scale            # (tq, tkv) f32
    s = jnp.where(mask_ref[0] > 0.5, s, _MASK_FILL)            # key mask (1, tkv)

    m_prev = m_ref[...]                                        # (tq, 1)
    m_new = jnp.maximum(m_prev, jnp.max(s, axis=-1, keepdims=True))
    alpha = jnp.exp(m_prev - m_new)
    p = jnp.exp(s - m_new)                                     # (tq, tkv)
    l_ref[...] = alpha * l_ref[...] + jnp.sum(p, axis=-1, keepdims=True)
    acc_ref[...] = alpha * acc_ref[...] + jax.lax.dot_general(
        p.astype(jnp.bfloat16), v_ref[0, 0].astype(jnp.bfloat16),
        (((1,), (0,)), ((), ())),
        preferred_element_type=jnp.float32)
    m_ref[...] = m_new

    @pl.when(ki == pl.num_programs(3) - 1)
    def _():
        inv_l = pl.reciprocal(l_ref[...], approx=True)         # EUP, ~free
        o_ref[0, 0] = (acc_ref[...] * inv_l).astype(o_ref.dtype)


def _flash_attention(qh, kh, vh, key_mask, scale):
    B, H, Sq, D = qh.shape
    Sk = kh.shape[2]
    tq = _pick_tile(Sq, 256, 8)
    tkv = _pick_tile(Sk, 512, 8)
    return pl.pallas_call(
        functools.partial(_flash_attn_kernel, scale=scale),
        out_shape=jax.ShapeDtypeStruct((B, H, Sq, D), qh.dtype),
        grid_spec=pltpu.PrefetchScalarGridSpec(
            num_scalar_prefetch=0,
            grid=(B, H, Sq // tq, Sk // tkv),
            in_specs=[
                pl.BlockSpec((1, 1, tq, D), lambda b, h, qi, ki: (b, h, qi, 0)),
                pl.BlockSpec((1, 1, tkv, D), lambda b, h, qi, ki: (b, h, ki, 0)),
                pl.BlockSpec((1, 1, tkv, D), lambda b, h, qi, ki: (b, h, ki, 0)),
                pl.BlockSpec((1, 1, tkv), lambda b, h, qi, ki: (b, 0, ki)),
            ],
            out_specs=pl.BlockSpec((1, 1, tq, D), lambda b, h, qi, ki: (b, h, qi, 0)),
            scratch_shapes=[
                pltpu.VMEM((tq, 1), jnp.float32),   # running max m
                pltpu.VMEM((tq, 1), jnp.float32),   # running denom l
                pltpu.VMEM((tq, D), jnp.float32),   # unnormalized accumulator
            ],
        ),
        compiler_params=pltpu.CompilerParams(
            dimension_semantics=("parallel", "parallel", "parallel", "arbitrary")),
    )(qh, kh, vh, key_mask)


# ----------------------------------------------------------------------------
# Output projection with fused head merge: (B, H, S, D) @ (H, D, N) -> (B, S, N)
# ----------------------------------------------------------------------------
def _head_merge_proj_kernel(ctx_ref, w_ref, b_ref, o_ref, acc_ref, *, num_heads):
    # ctx_ref: (1, H, tm, D); w_ref: (H, D, N) resident; b_ref: (1, N); o_ref: (1, tm, N)
    acc_ref[...] = jnp.zeros_like(acc_ref)
    for h in range(num_heads):
        acc_ref[...] += jax.lax.dot_general(
            ctx_ref[0, h].astype(jnp.bfloat16), w_ref[h].astype(jnp.bfloat16),
            (((1,), (0,)), ((), ())),
            preferred_element_type=jnp.float32)
    o_ref[0] = (acc_ref[...] + b_ref[...].astype(jnp.float32)).astype(o_ref.dtype)


def _merge_heads_project(ctx, w3, b2):
    B, H, S, D = ctx.shape
    N = w3.shape[-1]
    tm = _pick_tile(S, 256, 8)
    return pl.pallas_call(
        functools.partial(_head_merge_proj_kernel, num_heads=H),
        out_shape=jax.ShapeDtypeStruct((B, S, N), ctx.dtype),
        grid_spec=pltpu.PrefetchScalarGridSpec(
            num_scalar_prefetch=0,
            grid=(B, S // tm),
            in_specs=[
                pl.BlockSpec((1, H, tm, D), lambda b, s: (b, 0, s, 0)),
                pl.BlockSpec((H, D, N), lambda b, s: (0, 0, 0)),   # weight resident
                pl.BlockSpec((1, N), lambda b, s: (0, 0)),         # bias resident
            ],
            out_specs=pl.BlockSpec((1, tm, N), lambda b, s: (b, s, 0)),
            scratch_shapes=[pltpu.VMEM((tm, N), jnp.float32)],
        ),
        compiler_params=pltpu.CompilerParams(
            dimension_semantics=("parallel", "parallel")),
    )(ctx, w3, b2)


# ----------------------------------------------------------------------------
# Full forward, mirroring Attention.forward(q, k, v, mask)
# ----------------------------------------------------------------------------
def attention_forward(params, q, k, v, mask, num_heads):
    B, Sq, size = q.shape
    Sk = k.shape[1]
    H = num_heads
    assert size % H == 0
    D = size // H
    scale = 1.0 / math.sqrt(D)

    # One-time weight re-layout (size x size; negligible vs. activation traffic).
    wq3 = params["wq"].reshape(size, H, D).transpose(1, 0, 2)   # (H, K, D)
    wk3 = params["wk"].reshape(size, H, D).transpose(1, 0, 2)
    wv3 = params["wv"].reshape(size, H, D).transpose(1, 0, 2)
    bq3 = params["bq"].reshape(H, 1, D)
    bk3 = params["bk"].reshape(H, 1, D)
    bv3 = params["bv"].reshape(H, 1, D)
    wo3 = params["wo"].reshape(H, D, size)                      # pure reshape
    bo2 = params["bo"].reshape(1, size)

    # Pad sequence dims to sublane multiples so tiles stay (8,128)-legal.
    Sq_p = _round_up(Sq, 8)
    Sk_p = _round_up(Sk, 8)
    qp = _pad_axis(q, 1, Sq_p)
    kp = _pad_axis(k, 1, Sk_p)
    vp = _pad_axis(v, 1, Sk_p)

    # Key-padding mask as a tiny (B, 1, Sk_p) 0/1 array; padded keys masked out.
    # TODO(synk): masks that vary along the query axis (e.g. causal) would need a
    # (1, tq, tkv)-blocked mask input; only key masks are supported here.
    if mask is None:
        key_mask = jnp.ones((B, 1, Sk), jnp.float32)
    else:
        key_mask = jnp.broadcast_to(jnp.asarray(mask), (B, 1, 1, Sk))
        key_mask = key_mask.reshape(B, 1, Sk).astype(jnp.float32)
    key_mask = _pad_axis(key_mask, 2, Sk_p)

    # Projections (head split fused into the output layout: no transposes).
    kh = _project_to_heads(kp, wk3, bk3)     # (B, H, Sk_p, D)
    vh = _project_to_heads(vp, wv3, bv3)     # (B, H, Sk_p, D)
    qh = _project_to_heads(qp, wq3, bq3)     # (B, H, Sq_p, D)

    # Flash attention core.
    ctx = _flash_attention(qh, kh, vh, key_mask, scale)   # (B, H, Sq_p, D)

    # Output projection (head merge fused, lane-dense (B, Sq, size) output).
    out = _merge_heads_project(ctx, wo3, bo2)              # (B, Sq_p, size)
    return out[:, :Sq, :] if Sq_p != Sq else out


if __name__ == "__main__":
    key = jax.random.PRNGKey(0)
    batch, seq, size, num_heads = 2, 8, 32, 4
    head_size = size // num_heads

    ks = jax.random.split(key, 11)

    def init_linear(kw, kb, fan_in, fan_out):
        bound = 1.0 / (fan_in ** 0.5)
        W = jax.random.uniform(kw, (fan_in, fan_out), jnp.float32, -bound, bound)
        b = jax.random.uniform(kb, (fan_out,), jnp.float32, -bound, bound)
        return W, b

    wq, bq = init_linear(ks[0], ks[1], size, size)
    wk, bk = init_linear(ks[2], ks[3], size, size)
    wv, bv = init_linear(ks[4], ks[5], size, size)
    wo, bo = init_linear(ks[6], ks[7], size, size)
    params = dict(wq=wq, bq=bq, wk=wk, bk=bk, wv=wv, bv=bv, wo=wo, bo=bo)

    q = jax.random.normal(ks[8], (batch, seq, size), dtype=jnp.float32)
    k = jax.random.normal(ks[9], (batch, seq, size), dtype=jnp.float32)
    v = jax.random.normal(ks[10], (batch, seq, size), dtype=jnp.float32)

    # Padding mask (B, 1, 1, Sk): second batch element has 3 padded key positions.
    lengths = jnp.array([seq, seq - 3], dtype=jnp.int32)
    mask = (jnp.arange(seq)[None, :] < lengths[:, None]).reshape(batch, 1, 1, seq)

    out = attention_forward(params, q, k, v, mask, num_heads)
    out = jax.block_until_ready(out)

    # Pure-JAX reference mirroring the PyTorch forward exactly (f32 everywhere).
    def ref(params, q, k, v, mask):
        B = q.shape[0]
        hp = jax.lax.Precision.HIGHEST
        kk = (jnp.dot(k, params["wk"], precision=hp) + params["bk"]).reshape(
            B, -1, num_heads, head_size).transpose(0, 2, 1, 3)
        vv = (jnp.dot(v, params["wv"], precision=hp) + params["bv"]).reshape(
            B, -1, num_heads, head_size).transpose(0, 2, 1, 3)
        qq = (jnp.dot(q, params["wq"], precision=hp) + params["bq"]).reshape(
            B, -1, num_heads, head_size).transpose(0, 2, 1, 3)
        qq = qq / jnp.sqrt(jnp.float32(head_size))
        scores = jnp.einsum("bhqd,bhkd->bhqk", qq, kk, precision=hp)
        scores = jnp.where(mask, scores, -jnp.inf)
        attn = jax.nn.softmax(scores, axis=-1)
        ctx = jnp.einsum("bhqk,bhkd->bhqd", attn, vv, precision=hp)
        ctx = ctx.transpose(0, 2, 1, 3).reshape(B, -1, num_heads * head_size)
        return jnp.dot(ctx, params["wo"], precision=hp) + params["bo"]

    expect = ref(params, q, k, v, mask)
    err = float(jnp.max(jnp.abs(out - expect)))
    # bf16 MXU operands (f32 accumulation) -> looser tolerance than the pure-f32 ref.
    assert jnp.allclose(out, expect, atol=5e-2, rtol=5e-2), f"mismatch: {err}"

    print("KERNEL_OK")
</pallas_src>

<mosaic_0001>
module attributes {stable_mosaic.version = 11 : i64} {
  func.func @_head_split_proj_kernel(%arg0: i32, %arg1: i32, %arg2: memref<1x8x32xf32, #tpu.memory_space<vmem>>, %arg3: memref<4x32x8xf32, #tpu.memory_space<vmem>>, %arg4: memref<4x1x8xf32, #tpu.memory_space<vmem>>, %arg5: memref<1x4x8x8xf32, #tpu.memory_space<vmem>>) attributes {dimension_semantics = [#tpu.dimension_semantics<parallel>, #tpu.dimension_semantics<parallel>], iteration_bounds = array<i64: 2, 1>, scalar_prefetch = 0 : i64, scratch_operands = 0 : i64, tpu.core_type = #tpu.core_type<tc>, window_params = [{transform_indices = @transform_0, window_bounds = array<i64: 1, 8, 32>}, {pipeline_mode = #tpu.pipeline_mode<synchronous>, transform_indices = @transform_1, window_bounds = array<i64: 4, 32, 8>}, {pipeline_mode = #tpu.pipeline_mode<synchronous>, transform_indices = @transform_2, window_bounds = array<i64: 4, 1, 8>}, {transform_indices = @transform_3, window_bounds = array<i64: 1, 4, 8, 8>}]} {
    %c0 = arith.constant 0 : index
    %c0_0 = arith.constant 0 : index
    %c0_1 = arith.constant 0 : index
    %0 = vector.load %arg2[%c0, %c0_0, %c0_1] : memref<1x8x32xf32, #tpu.memory_space<vmem>>, vector<1x8x32xf32>
    %1 = vector.shape_cast %0 : vector<1x8x32xf32> to vector<8x32xf32>
    %2 = arith.truncf %1 : vector<8x32xf32> to vector<8x32xbf16>
    %c0_2 = arith.constant 0 : index
    %c0_3 = arith.constant 0 : index
    %c0_4 = arith.constant 0 : index
    %3 = vector.load %arg3[%c0_2, %c0_3, %c0_4] : memref<4x32x8xf32, #tpu.memory_space<vmem>>, vector<1x32x8xf32>
    %4 = vector.shape_cast %3 : vector<1x32x8xf32> to vector<32x8xf32>
    %5 = arith.truncf %4 : vector<32x8xf32> to vector<32x8xbf16>
    %cst = arith.constant dense<0.000000e+00> : vector<8x8xf32>
    %6 = tpu.matmul %2, %5, %cst {dimension_numbers = #tpu.dot_dimension_numbers<[1], [0], [0], [1], [0, 0, 1, 1], [], []>} : vector<8x32xbf16>, vector<32x8xbf16>, vector<8x8xf32> -> vector<8x8xf32>
    %c0_5 = arith.constant 0 : index
    %c0_6 = arith.constant 0 : index
    %c0_7 = arith.constant 0 : index
    %7 = vector.load %arg4[%c0_5, %c0_6, %c0_7] : memref<4x1x8xf32, #tpu.memory_space<vmem>>, vector<1x1x8xf32>
    %8 = vector.shape_cast %7 : vector<1x1x8xf32> to vector<1x8xf32>
    %9 = vector.broadcast %8 : vector<1x8xf32> to vector<8x8xf32>
    %10 = arith.addf %6, %9 : vector<8x8xf32>
    %c0_8 = arith.constant 0 : index
    %c0_9 = arith.constant 0 : index
    %c0_10 = arith.constant 0 : index
    %c0_11 = arith.constant 0 : index
    %11 = vector.load %arg5[%c0_8, %c0_9, %c0_10, %c0_11] : memref<1x4x8x8xf32, #tpu.memory_space<vmem>>, vector<1x1x8x8xf32>
    %12 = vector.shape_cast %11 : vector<1x1x8x8xf32> to vector<8x8xf32>
    %13 = vector.shape_cast %10 : vector<8x8xf32> to vector<1x1x8x8xf32>
    tpu.vector_store %arg5[%c0_8, %c0_9, %c0_10, %c0_11], %13 {strides = array<i32>} : memref<1x4x8x8xf32, #tpu.memory_space<vmem>>, vector<1x1x8x8xf32>,
    %c1 = arith.constant 1 : index
    %c0_12 = arith.constant 0 : index
    %c0_13 = arith.constant 0 : index
    %14 = vector.load %arg3[%c1, %c0_12, %c0_13] : memref<4x32x8xf32, #tpu.memory_space<vmem>>, vector<1x32x8xf32>
    %15 = vector.shape_cast %14 : vector<1x32x8xf32> to vector<32x8xf32>
    %16 = arith.truncf %15 : vector<32x8xf32> to vector<32x8xbf16>
    %cst_14 = arith.constant dense<0.000000e+00> : vector<8x8xf32>
    %17 = tpu.matmul %2, %16, %cst_14 {dimension_numbers = #tpu.dot_dimension_numbers<[1], [0], [0], [1], [0, 0, 1, 1], [], []>} : vector<8x32xbf16>, vector<32x8xbf16>, vector<8x8xf32> -> vector<8x8xf32>
    %c1_15 = arith.constant 1 : index
    %c0_16 = arith.constant 0 : index
    %c0_17 = arith.constant 0 : index
    %18 = vector.load %arg4[%c1_15, %c0_16, %c0_17] : memref<4x1x8xf32, #tpu.memory_space<vmem>>, vector<1x1x8xf32>
    %19 = vector.shape_cast %18 : vector<1x1x8xf32> to vector<1x8xf32>
    %20 = vector.broadcast %19 : vector<1x8xf32> to vector<8x8xf32>
    %21 = arith.addf %17, %20 : vector<8x8xf32>
    %c0_18 = arith.constant 0 : index
    %c1_19 = arith.constant 1 : index
    %c0_20 = arith.constant 0 : index
    %c0_21 = arith.constant 0 : index
    %22 = vector.load %arg5[%c0_18, %c1_19, %c0_20, %c0_21] : memref<1x4x8x8xf32, #tpu.memory_space<vmem>>, vector<1x1x8x8xf32>
    %23 = vector.shape_cast %22 : vector<1x1x8x8xf32> to vector<8x8xf32>
    %24 = vector.shape_cast %21 : vector<8x8xf32> to vector<1x1x8x8xf32>
    tpu.vector_store %arg5[%c0_18, %c1_19, %c0_20, %c0_21], %24 {strides = array<i32>} : memref<1x4x8x8xf32, #tpu.memory_space<vmem>>, vector<1x1x8x8xf32>,
    %c2 = arith.constant 2 : index
    %c0_22 = arith.constant 0 : index
    %c0_23 = arith.constant 0 : index
    %25 = vector.load %arg3[%c2, %c0_22, %c0_23] : memref<4x32x8xf32, #tpu.memory_space<vmem>>, vector<1x32x8xf32>
    %26 = vector.shape_cast %25 : vector<1x32x8xf32> to vector<32x8xf32>
    %27 = arith.truncf %26 : vector<32x8xf32> to vector<32x8xbf16>
    %cst_24 = arith.constant dense<0.000000e+00> : vector<8x8xf32>
    %28 = tpu.matmul %2, %27, %cst_24 {dimension_numbers = #tpu.dot_dimension_numbers<[1], [0], [0], [1], [0, 0, 1, 1], [], []>} : vector<8x32xbf16>, vector<32x8xbf16>, vector<8x8xf32> -> vector<8x8xf32>
    %c2_25 = arith.constant 2 : index
    %c0_26 = arith.constant 0 : index
    %c0_27 = arith.constant 0 : index
    %29 = vector.load %arg4[%c2_25, %c0_26, %c0_27] : memref<4x1x8xf32, #tpu.memory_space<vmem>>, vector<1x1x8xf32>
    %30 = vector.shape_cast %29 : vector<1x1x8xf32> to vector<1x8xf32>
    %31 = vector.broadcast %30 : vector<1x8xf32> to vector<8x8xf32>
    %32 = arith.addf %28, %31 : vector<8x8xf32>
    %c0_28 = arith.constant 0 : index
    %c2_29 = arith.constant 2 : index
    %c0_30 = arith.constant 0 : index
    %c0_31 = arith.constant 0 : index
    %33 = vector.load %arg5[%c0_28, %c2_29, %c0_30, %c0_31] : memref<1x4x8x8xf32, #tpu.memory_space<vmem>>, vector<1x1x8x8xf32>
    %34 = vector.shape_cast %33 : vector<1x1x8x8xf32> to vector<8x8xf32>
    %35 = vector.shape_cast %32 : vector<8x8xf32> to vector<1x1x8x8xf32>
    tpu.vector_store %arg5[%c0_28, %c2_29, %c0_30, %c0_31], %35 {strides = array<i32>} : memref<1x4x8x8xf32, #tpu.memory_space<vmem>>, vector<1x1x8x8xf32>,
    %c3 = arith.constant 3 : index
    %c0_32 = arith.constant 0 : index
    %c0_33 = arith.constant 0 : index
    %36 = vector.load %arg3[%c3, %c0_32, %c0_33] : memref<4x32x8xf32, #tpu.memory_space<vmem>>, vector<1x32x8xf32>
    %37 = vector.shape_cast %36 : vector<1x32x8xf32> to vector<32x8xf32>
    %38 = arith.truncf %37 : vector<32x8xf32> to vector<32x8xbf16>
    %cst_34 = arith.constant dense<0.000000e+00> : vector<8x8xf32>
    %39 = tpu.matmul %2, %38, %cst_34 {dimension_numbers = #tpu.dot_dimension_numbers<[1], [0], [0], [1], [0, 0, 1, 1], [], []>} : vector<8x32xbf16>, vector<32x8xbf16>, vector<8x8xf32> -> vector<8x8xf32>
    %c3_35 = arith.constant 3 : index
    %c0_36 = arith.constant 0 : index
    %c0_37 = arith.constant 0 : index
    %40 = vector.load %arg4[%c3_35, %c0_36, %c0_37] : memref<4x1x8xf32, #tpu.memory_space<vmem>>, vector<1x1x8xf32>
    %41 = vector.shape_cast %40 : vector<1x1x8xf32> to vector<1x8xf32>
    %42 = vector.broadcast %41 : vector<1x8xf32> to vector<8x8xf32>
    %43 = arith.addf %39, %42 : vector<8x8xf32>
    %c0_38 = arith.constant 0 : index
    %c3_39 = arith.constant 3 : index
    %c0_40 = arith.constant 0 : index
    %c0_41 = arith.constant 0 : index
    %44 = vector.load %arg5[%c0_38, %c3_39, %c0_40, %c0_41] : memref<1x4x8x8xf32, #tpu.memory_space<vmem>>, vector<1x1x8x8xf32>
    %45 = vector.shape_cast %44 : vector<1x1x8x8xf32> to vector<8x8xf32>
    %46 = vector.shape_cast %43 : vector<8x8xf32> to vector<1x1x8x8xf32>
    tpu.vector_store %arg5[%c0_38, %c3_39, %c0_40, %c0_41], %46 {strides = array<i32>} : memref<1x4x8x8xf32, #tpu.memory_space<vmem>>, vector<1x1x8x8xf32>,
    return
  }
  func.func @transform_0(%arg0: i32, %arg1: i32) -> (i32, i32, i32) {
    %c0_i32 = arith.constant 0 : i32
    %c0_i32_0 = arith.constant 0 : i32
    return %arg0, %arg1, %c0_i32 : i32, i32, i32
  }
  func.func @transform_1(%arg0: i32, %arg1: i32) -> (i32, i32, i32) {
    %c0_i32 = arith.constant 0 : i32
    %c0_i32_0 = arith.constant 0 : i32
    %c0_i32_1 = arith.constant 0 : i32
    %c0_i32_2 = arith.constant 0 : i32
    return %c0_i32, %c0_i32_0, %c0_i32_1 : i32, i32, i32
  }
  func.func @transform_2(%arg0: i32, %arg1: i32) -> (i32, i32, i32) {
    %c0_i32 = arith.constant 0 : i32
    %c0_i32_0 = arith.constant 0 : i32
    %c0_i32_1 = arith.constant 0 : i32
    %c0_i32_2 = arith.constant 0 : i32
    return %c0_i32, %c0_i32_0, %c0_i32_1 : i32, i32, i32
  }
  func.func @transform_3(%arg0: i32, %arg1: i32) -> (i32, i32, i32, i32) {
    %c0_i32 = arith.constant 0 : i32
    %c0_i32_0 = arith.constant 0 : i32
    %c0_i32_1 = arith.constant 0 : i32
    return %arg0, %c0_i32, %arg1, %c0_i32_0 : i32, i32, i32, i32
  }
}

</mosaic_0001>

<llo_original>
// kernel: tpu_custom_call.1
$region0: #{tpu_custom_call.1}
  #allocation0 [shape = 'u32[]', space=smem, size = 0x4, offset = 0x4, fixed_abs, tag = 'smem constant byte address 0x4 - core index']
  #allocation1 [shape = 'u32[72,128]{1,0:T(1,128)}', space=vmem, size = 0x9000, scoped, tag = 'internal scratch']
  %s0 = inlined_call_operand.vmem [shape: f32[2,8,32], index: 0, kind: input, shape index: {}]
  %s1 = inlined_call_operand.vmem [shape: f32[4,32,8], index: 1, kind: input, shape index: {}]
  %s2 = inlined_call_operand.vmem [shape: f32[4,1,8], index: 2, kind: input, shape index: {}]
  %s3 = inlined_call_operand.hbm [shape: f32[2,4,8,8], index: 3, kind: output, shape index: {}]
  %s4 = sld [smem:[#allocation0]]
  $region45: #{tpu_custom_call.1} parent=0
    _
  %s6 = ssub.s32 1, %s4
  %s7 = scalar_select 0, %s6, %s4
  $region1: #{tpu_custom_call.1} parent=0
    #allocation2 [shape = 'u8[32768]{0}', space=vmem, size = 0x8000, scoped, tag = 'output window, operand 0']
    #allocation3 [shape = 's32[2]{0}', space=sflag, size = 0x8, scoped, tag = 'scoped memory for tpu_custom_call.1']
    %8 = vsyncpa [#allocation3], 0
    %s9 = scalar_lea.sflag [#allocation3], 1
    %10 = vsyncpa %s9, 0
    loop: start=0, step=1, limit=4
    $region2: #{tpu_custom_call.1} parent=1 // loop_pre_header
      _
    $region3: #{tpu_custom_call.1} parent=1 // loop_header
      %s12 = sphi 0, %s16
      %p13 = scmp.ge.s32.totalorder %s12, 4
      %s19 = sphi 0, %s31
      %s20 = sphi 0, %s27
      %s21 = sphi 0, %s19
      %s22 = sphi 0, %s20
      %s23 = sphi 0, %s21
      %s24 = sphi 0, %s22
      %s36 = sphi 0, %s38
      %s39 = sphi 0, %s36
      %s40 = sphi 0, %s39
      %s56 = sphi 0, %s40
      %s60 = sphi 0, %s60
      %s62 = sphi 0, %s60
      %s63 = sphi 0, %s62
      %s77 = sphi 0, %s63
      %s81 = sphi 0, %s81
      %s83 = sphi 0, %s81
      %s84 = sphi 0, %s83
      %s98 = sphi 0, %s84
      %s106 = sphi 0, %s108
      %s109 = sphi 0, %s106
      %s110 = sphi 0, %s109
      %s126 = sphi 0, %s110
    $region4: #{tpu_custom_call.1} parent=1 // loop_header_branch
      %15 = sbr.rel (%p13) target = $region8
    $region5: #{tpu_custom_call.1} parent=1 // loop_body
      %s17 = ssub.s32 %s12, 1
      %s18 = ssub.s32 %s12, 2
      %s25 = sadd.s32 1, %s20
      %p26 = scmp.ge.s32.totalorder %s25, 1
      %s27 = scalar_select %p26, 0, %s25
      %s28 = sadd.s32 1, %s19
      %s29 = scalar_select %p26, %s28, %s19
      %p30 = scmp.ge.s32.totalorder %s29, 2
      %s31 = scalar_select %p30, 0, %s29
      %s32 = ssub.s32 %s19, %s31
      %s33 = ssub.s32 %s20, %s27
      %s34 = sor.u32 %s32, %s33
      %p35 = scmp.eq.s32.totalorder %s34, 0
      %s37 = sadd.s32 %s36, 1
      %s38 = scalar_select %p35, %s36, %s37
      %p41 = pneg %p35
      %p42 = scmp.eq.s32.totalorder %s12, 1
      %p43 = por %p41, %p42
      %p44 = scmp.ne.s32.totalorder %s36, %s39
      %p45 = scmp.eq.s32.totalorder %s12, 0
      %p46 = por %p44, %p45
      %p47 = scmp.ne.s32.totalorder %s36, %s39
      %p48 = scmp.eq.s32.totalorder %s17, 1
      %p49 = por %p47, %p48
      %p50 = scmp.ne.s32.totalorder %s39, %s40
      %p51 = scmp.eq.s32.totalorder %s17, 0
      %p52 = por %p50, %p51
      %p53 = scmp.ne.s32.totalorder %s39, %s40
      %p54 = scmp.eq.s32.totalorder %s18, 1
      %p55 = por %p53, %p54
      %p57 = scmp.ne.s32.totalorder %s40, %s56
      %p58 = scmp.eq.s32.totalorder %s18, 0
      %p59 = por %p57, %p58
      %s61 = sadd.s32 %s60, 1
      %p64 = scmp.eq.s32.totalorder %s12, 1
      %p65 = scmp.ne.s32.totalorder %s60, %s62
      %p66 = scmp.eq.s32.totalorder %s12, 0
      %p67 = por %p65, %p66
      %p68 = scmp.ne.s32.totalorder %s60, %s62
      %p69 = scmp.eq.s32.totalorder %s17, 1
      %p70 = por %p68, %p69
      %p71 = scmp.ne.s32.totalorder %s62, %s63
      %p72 = scmp.eq.s32.totalorder %s17, 0
      %p73 = por %p71, %p72
      %p74 = scmp.ne.s32.totalorder %s62, %s63
      %p75 = scmp.eq.s32.totalorder %s18, 1
      %p76 = por %p74, %p75
      %p78 = scmp.ne.s32.totalorder %s63, %s77
      %p79 = scmp.eq.s32.totalorder %s18, 0
      %p80 = por %p78, %p79
      %s82 = sadd.s32 %s81, 1
      %p85 = scmp.eq.s32.totalorder %s12, 1
      %p86 = scmp.ne.s32.totalorder %s81, %s83
      %p87 = scmp.eq.s32.totalorder %s12, 0
      %p88 = por %p86, %p87
      %p89 = scmp.ne.s32.totalorder %s81, %s83
      %p90 = scmp.eq.s32.totalorder %s17, 1
      %p91 = por %p89, %p90
      %p92 = scmp.ne.s32.totalorder %s83, %s84
      %p93 = scmp.eq.s32.totalorder %s17, 0
      %p94 = por %p92, %p93
      %p95 = scmp.ne.s32.totalorder %s83, %s84
      %p96 = scmp.eq.s32.totalorder %s18, 1
      %p97 = por %p95, %p96
      %p99 = scmp.ne.s32.totalorder %s84, %s98
      %p100 = scmp.eq.s32.totalorder %s18, 0
      %p101 = por %p99, %p100
      %s102 = ssub.s32 %s19, %s31
      %s103 = ssub.s32 %s20, %s27
      %s104 = sor.u32 %s102, %s103
      %p105 = scmp.eq.s32.totalorder %s104, 0
      %s107 = sadd.s32 %s106, 1
      %s108 = scalar_select %p105, %s106, %s107
      %p111 = pneg %p105
      %p112 = scmp.eq.s32.totalorder %s12, 1
      %p113 = por %p111, %p112
      %p114 = scmp.ne.s32.totalorder %s106, %s109
      %p115 = scmp.eq.s32.totalorder %s12, 0
      %p116 = por %p114, %p115
      %p117 = scmp.ne.s32.totalorder %s106, %s109
      %p118 = scmp.eq.s32.totalorder %s17, 1
      %p119 = por %p117, %p118
      %p120 = scmp.ne.s32.totalorder %s109, %s110
      %p121 = scmp.eq.s32.totalorder %s17, 0
      %p122 = por %p120, %p121
      %p123 = scmp.ne.s32.totalorder %s109, %s110
      %p124 = scmp.eq.s32.totalorder %s18, 1
      %p125 = por %p123, %p124
      %p127 = scmp.ne.s32.totalorder %s110, %s126
      %p128 = scmp.eq.s32.totalorder %s18, 0
      %p129 = por %p127, %p128
      %p130 = scmp.le.s32.totalorder 1, %s12
      %p131 = scmp.lt.s32.totalorder %s12, 3
      %p132 = pnand %p130, %p131
      %p133 = pneg %p132
      // Predicated region
      $region9: #{tpu_custom_call.1} parent=5 // pred_check
        _
      $region10: #{tpu_custom_call.1} parent=5 // pred_check_branch
        %135 = sbr.rel (%p132) target = $region12
      $region11: #{tpu_custom_call.1} parent=5 // pred_region
        %s136 = ssub.s32 %s12, 1
        // Predicated region
        $region13: #{tpu_custom_call.1} parent=11 // pred_check
          %p137 = pneg %p73
        $region14: #{tpu_custom_call.1} parent=11 // pred_check_branch
          %139 = sbr.rel (%p137) target = $region16
        $region15: #{tpu_custom_call.1} parent=11 // pred_region
          _
        $region16: #{tpu_custom_call.1} parent=11 // pred_fallthru
          _
        // Predicated region
        $region17: #{tpu_custom_call.1} parent=11 // pred_check
          %p140 = pneg %p94
        $region18: #{tpu_custom_call.1} parent=11 // pred_check_branch
          %142 = sbr.rel (%p140) target = $region20
        $region19: #{tpu_custom_call.1} parent=11 // pred_region
          _
        $region20: #{tpu_custom_call.1} parent=11 // pred_fallthru
          _
      $region12: #{tpu_custom_call.1} parent=5 // pred_fallthru
        _
      %p143 = scmp.lt.s32.totalorder %s12, 2
      // Predicated region
      $region21: #{tpu_custom_call.1} parent=5 // pred_check
        %p144 = pneg %p143
      $region22: #{tpu_custom_call.1} parent=5 // pred_check_branch
        %146 = sbr.rel (%p144) target = $region24
      $region23: #{tpu_custom_call.1} parent=5 // pred_region
        // Predicated region
        $region25: #{tpu_custom_call.1} parent=23 // pred_check
          %p147 = pneg %p46
        $region26: #{tpu_custom_call.1} parent=23 // pred_check_branch
          %149 = sbr.rel (%p147) target = $region28
        $region27: #{tpu_custom_call.1} parent=23 // pred_region
          %p150 = scmp.lt.s32.totalorder %s19, 1
          %s151 = scalar_select %p150, %s19, 1
          %p152 = scmp.lt.s32.totalorder %s20, 0
          %s153 = scalar_select %p152, %s20, 0
          %s154 = sadd.s32 %s153, %s151
          %s155 = smul.addr %s154, 8
          %s156 = scalar_lea.vmem %s0, %s155
        $region28: #{tpu_custom_call.1} parent=23 // pred_fallthru
          _
      $region24: #{tpu_custom_call.1} parent=5 // pred_fallthru
        _
      %p157 = scmp.le.s32.totalorder 1, %s12
      %p158 = scmp.lt.s32.totalorder %s12, 3
      %p159 = pnand %p157, %p158
      %p160 = pneg %p159
      // Predicated region
      $region29: #{tpu_custom_call.1} parent=5 // pred_check
        _
      $region30: #{tpu_custom_call.1} parent=5 // pred_check_branch
        %162 = sbr.rel (%p159) target = $region32
      $region31: #{tpu_custom_call.1} parent=5 // pred_region
        %s163 = ssub.s32 %s12, 1
        %p164 = scmp.lt.s32.totalorder %s21, 1
        %s165 = scalar_select %p164, %s21, 1
        %p166 = scmp.lt.s32.totalorder %s22, 0
        %s167 = scalar_select %p166, %s22, 0
        %s168 = sadd.s32 %s167, %s165
        %s169 = smul.addr %s168, 8
        %s170 = scalar_lea.vmem %s0, %s169
        %p171 = pneg %p52
        %p172 = pneg %p49
        %p173 = pneg %p73
        %p174 = pneg %p70
        %p175 = pneg %p94
        %p176 = pneg %p91
        %p177 = pneg %p122
        %p178 = pneg %p119
        %s179 = sand.u32 %s109, 1
        %s180 = scalar_lea.sflag [#allocation3], %s179
        %s181 = sand.u32 %s109, 1
        %s182 = smul.addr %s181, 32
        %s183 = scalar_lea.vmem [#allocation2], %s182
        %p184 = scmp.lt.s32.totalorder %s21, 1
        %s185 = scalar_select %p184, %s21, 1
        %p186 = scmp.lt.s32.totalorder %s22, 0
        %s187 = scalar_select %p186, %s22, 0
        %s188 = sadd.s32 %s187, %s185
        %s189 = smul.addr %s188, 8
        %s190 = scalar_lea.vmem %s0, %s189
        %v192 = vld [vmem:[%s190] sm:$0xff]
        %v193 = vpack.c.bf16 %v192, %v192
        %v194 = vld [vmem:[%s1] sm:$0xff]
        %v195 = vld [vmem:[%s1 + $0x8] sm:$0xff]
        %v196 = vld [vmem:[%s1 + $0x10] sm:$0xff]
        %v197 = vld [vmem:[%s1 + $0x18] sm:$0xff]
        %v198 = vpack.c.bf16 %v195, %v194
        %v199 = vpack.c.bf16 %v197, %v196
        %v200 = vld [vmem:[%s2] sm:$0x1]
        %v202 = vperm.slane %v200, 0
        %vm204 = vcmask 261120
        %v206 = vsel %vm204, %v193, 0
        %208 = vmatpush.bf16.msra.mxu0 0
        %209 = vmatpush.bf16.msra.mxu0 0
        %210 = vmatpush.bf16.msra.mxu0 0
        %211 = vmatpush.bf16.msra.mxu0 0
        %212 = vmatpush.bf16.msra.mxu0 0
        %213 = vmatpush.bf16.msra.mxu0 0
        %214 = vmatpush.bf16.msra.mxu0 %v199
        %215 = vmatpush.bf16.msra.mxu0 %v198
        %216 = vmatmul.bf16.gmra.mxu0 %v206
        %v217 = vpop.f32.mrf.mxu0
        %v218 = vadd.f32 %v202, %v217
        %v219 = vpop.f32.mrf.mxu0
        %220 = vdwg.mxu0
        %vm221 = vcmask 64512
        %222 = vst.msk [vmem:[%s183] sm:$0xff] %vm221, %v218
        %s223 = scalar_lea.vmem %s1, 32
        %v224 = vld [vmem:[%s223] sm:$0xff]
        %v225 = vld [vmem:[%s223 + $0x8] sm:$0xff]
        %v226 = vld [vmem:[%s223 + $0x10] sm:$0xff]
        %v227 = vld [vmem:[%s223 + $0x18] sm:$0xff]
        %v228 = vpack.c.bf16 %v225, %v224
        %v229 = vpack.c.bf16 %v227, %v226
        %s230 = scalar_lea.vmem %s2, 1
        %v231 = vld [vmem:[%s230] sm:$0x1]
        %v233 = vperm.slane %v231, 0
        %235 = vmatpush.bf16.msra.mxu0 0
        %236 = vmatpush.bf16.msra.mxu0 0
        %237 = vmatpush.bf16.msra.mxu0 0
        %238 = vmatpush.bf16.msra.mxu0 0
        %239 = vmatpush.bf16.msra.mxu0 0
        %240 = vmatpush.bf16.msra.mxu0 0
        %241 = vmatpush.bf16.msra.mxu0 %v229
        %242 = vmatpush.bf16.msra.mxu0 %v228
        %243 = vmatmul.bf16.gmra.mxu0 %v206
        %v244 = vpop.f32.mrf.mxu0
        %v245 = vadd.f32 %v233, %v244
        %v246 = vpop.f32.mrf.mxu0
        %247 = vdwg.mxu0
        %s248 = scalar_lea.vmem %s183, 8 [#allocation2]
        %249 = vst.msk [vmem:[%s248] sm:$0xff] %vm221, %v245
        %s250 = scalar_lea.vmem %s1, 64
        %v251 = vld [vmem:[%s250] sm:$0xff]
        %v252 = vld [vmem:[%s250 + $0x8] sm:$0xff]
        %v253 = vld [vmem:[%s250 + $0x10] sm:$0xff]
        %v254 = vld [vmem:[%s250 + $0x18] sm:$0xff]
        %v255 = vpack.c.bf16 %v252, %v251
        %v256 = vpack.c.bf16 %v254, %v253
        %s257 = scalar_lea.vmem %s2, 2
        %v258 = vld [vmem:[%s257] sm:$0x1]
        %v260 = vperm.slane %v258, 0
        %262 = vmatpush.bf16.msra.mxu0 0
        %263 = vmatpush.bf16.msra.mxu0 0
        %264 = vmatpush.bf16.msra.mxu0 0
        %265 = vmatpush.bf16.msra.mxu0 0
        %266 = vmatpush.bf16.msra.mxu0 0
        %267 = vmatpush.bf16.msra.mxu0 0
        %268 = vmatpush.bf16.msra.mxu0 %v256
        %269 = vmatpush.bf16.msra.mxu0 %v255
        %270 = vmatmul.bf16.gmra.mxu0 %v206
        %v271 = vpop.f32.mrf.mxu0
        %v272 = vadd.f32 %v260, %v271
        %v273 = vpop.f32.mrf.mxu0
        %274 = vdwg.mxu0
        %s275 = scalar_lea.vmem %s183, 16 [#allocation2]
        %276 = vst.msk [vmem:[%s275] sm:$0xff] %vm221, %v272
        %s277 = scalar_lea.vmem %s1, 96
        %v278 = vld [vmem:[%s277] sm:$0xff]
        %v279 = vld [vmem:[%s277 + $0x8] sm:$0xff]
        %v280 = vld [vmem:[%s277 + $0x10] sm:$0xff]
        %v281 = vld [vmem:[%s277 + $0x18] sm:$0xff]
        %v282 = vpack.c.bf16 %v279, %v278
        %v283 = vpack.c.bf16 %v281, %v280
        %s284 = scalar_lea.vmem %s2, 3
        %v285 = vld [vmem:[%s284] sm:$0x1]
        %v287 = vperm.slane %v285, 0
        %289 = vmatpush.bf16.msra.mxu0 0
        %290 = vmatpush.bf16.msra.mxu0 0
        %291 = vmatpush.bf16.msra.mxu0 0
        %292 = vmatpush.bf16.msra.mxu0 0
        %293 = vmatpush.bf16.msra.mxu0 0
        %294 = vmatpush.bf16.msra.mxu0 0
        %295 = vmatpush.bf16.msra.mxu0 %v283
        %296 = vmatpush.bf16.msra.mxu0 %v282
        %297 = vmatmul.bf16.gmra.mxu0 %v206
        %v298 = vpop.f32.mrf.mxu0
        %v299 = vadd.f32 %v287, %v298
        %v300 = vpop.f32.mrf.mxu0
        %301 = vdwg.mxu0
        %s302 = scalar_lea.vmem %s183, 24 [#allocation2]
        %303 = vst.msk [vmem:[%s302] sm:$0xff] %vm221, %v299
        %s304 = sand.u32 %s109, 1
        %s305 = scalar_lea.sflag [#allocation3], %s304
        %s306 = sand.u32 %s109, 1
        %s307 = smul.addr %s306, 32
        %s308 = scalar_lea.vmem [#allocation2], %s307
        // Predicated region
        $region33: #{tpu_custom_call.1} parent=31 // pred_check
          %p309 = pneg %p119
        $region34: #{tpu_custom_call.1} parent=31 // pred_check_branch
          %311 = sbr.rel (%p309) target = $region36
        $region35: #{tpu_custom_call.1} parent=31 // pred_region
          %313 = vsyncadd %s305, 0
          %s314 = smul.addr %s21, 4
          %s315 = sadd.s32 %s22, %s314
          %s316 = smul.addr %s315, 8
          %s317 = scalar_lea.hbm %s3, %s316
          %s318 = sshll.u32 %s308, 4
          %s319 = int_to_ptr.vmem [resolvable:$true] %s318
          %s320 = sshll.u32 %s317, 4
          %s321 = int_to_ptr.hbm [resolvable:$true] %s320
          %326 = dma.vmem_to_hbm [thread:$0]  %s319, 512, %s321, %s305, 128, 128, 8
        $region36: #{tpu_custom_call.1} parent=31 // pred_fallthru
          _
      $region32: #{tpu_custom_call.1} parent=5 // pred_fallthru
        _
      %p327 = scmp.le.s32.totalorder 2, %s12
      // Predicated region
      $region37: #{tpu_custom_call.1} parent=5 // pred_check
        %p328 = pneg %p327
      $region38: #{tpu_custom_call.1} parent=5 // pred_check_branch
        %330 = sbr.rel (%p328) target = $region40
      $region39: #{tpu_custom_call.1} parent=5 // pred_region
        %s331 = ssub.s32 %s12, 2
        // Predicated region
        $region41: #{tpu_custom_call.1} parent=39 // pred_check
          %p332 = pneg %p125
        $region42: #{tpu_custom_call.1} parent=39 // pred_check_branch
          %334 = sbr.rel (%p332) target = $region44
        $region43: #{tpu_custom_call.1} parent=39 // pred_region
          %s335 = sand.u32 %s110, 1
          %s336 = scalar_lea.sflag [#allocation3], %s335
          %s337 = sand.u32 %s110, 1
          %s338 = smul.addr %s337, 32
          %s339 = scalar_lea.vmem [#allocation2], %s338
          %341 = dma.done %s336, 512
        $region44: #{tpu_custom_call.1} parent=39 // pred_fallthru
          _
      $region40: #{tpu_custom_call.1} parent=5 // pred_fallthru
        _
    $region6: #{tpu_custom_call.1} parent=1 // loop_footer
      %s16 = sadd.s32 1, %s12
    $region7: #{tpu_custom_call.1} parent=1 // loop_footer_branch
      %11 = sbr.rel target = $region3
    $region8: #{tpu_custom_call.1} parent=1 // loop_exit
      _
    %342 = vsyncpa [#allocation3], 1
    %s343 = scalar_lea.sflag [#allocation3], 1
    %344 = vsyncpa %s343, 1

</llo_original>
